<compile_context>
chip_gen: v7x
topology: tpu7x:2x2x1
jax: 0.10.0
libtpu: 0.0.40
codegen_flags: <defaults>
</compile_context>

<pallas_src>
import jax
import jax.numpy as jnp
from jax.experimental import pallas as pl
from jax.experimental.pallas import tpu as pltpu


def _round_up(a: int, m: int) -> int:
    return (a + m - 1) // m * m


# Large negative finite bias for padded classes: exp(pad - max) underflows to
# exactly 0.0 in f32, so padded lanes contribute nothing to the softmax.
_NEG_BIG = -1e30


def classifier_kernel(x_ref, w1_ref, b1_ref, w2_ref, b2_ref, o_ref):
    # fc1: bf16 MXU operands, f32 accumulation, + bias, ReLU.
    h = jnp.dot(x_ref[...], w1_ref[...], preferred_element_type=jnp.float32)
    h = jnp.maximum(h + b1_ref[...], 0.0)

    # proj: hidden cast back to bf16 for the MXU feed; padded classes carry a
    # huge negative bias so they drop out of the softmax exactly.
    logits = jnp.dot(h.astype(jnp.bfloat16), w2_ref[...],
                     preferred_element_type=jnp.float32)
    logits = logits + b2_ref[...]

    # Numerically stable softmax over the lane-dense (padded) class axis.
    m = jnp.max(logits, axis=-1, keepdims=True)
    e = jnp.exp(logits - m)
    denom = jnp.sum(e, axis=-1, keepdims=True)
    # Exact normalization (approx=True broke the row-sum == 1 check).
    o_ref[...] = (e * pl.reciprocal(denom, approx=False)).astype(o_ref.dtype)


def _classifier_forward(x, w1_p, b1_p, w2_p, b2_p, num_speakers, *, tb):
    B, E = x.shape
    Sp = w2_p.shape[1]
    S = num_speakers

    # Batch tiling: sublane-align, prefer big tiles (per-grid-step overhead
    # ~0.35us), but keep >=2 grid steps when the batch allows so both v7x
    # TensorCores get work on the "parallel" axis.
    Bp = _round_up(B, 8)
    TB = min(tb, Bp)
    if Bp // TB < 2 and Bp >= 16:
        TB = _round_up(Bp // 2, 8)
    Bp = _round_up(Bp, TB)

    # Cast BEFORE padding; only the batch axis is padded (E stays unpadded).
    x_p = x.astype(jnp.bfloat16)
    if Bp != B:
        x_p = jnp.pad(x_p, ((0, Bp - B), (0, 0)))

    # Advisory cost for XLA's scheduler around the custom call.
    cost = pl.CostEstimate(
        flops=2 * Bp * E * E + 2 * Bp * E * Sp,
        transcendentals=Bp * Sp,
        bytes_accessed=(x_p.size * 2 + w1_p.size * 2 + b1_p.size * 4
                        + w2_p.size * 2 + b2_p.size * 4 + Bp * Sp * 4),
    )

    # VMEM budget: double-buffered activations + resident weights (default
    # double-buffer allocation). Only raise the scoped limit when needed.
    act_bytes = 2 * (TB * E * 2 + TB * Sp * 4)
    wgt_bytes = 2 * (E * E * 2 + E * 4 + E * Sp * 2 + Sp * 4)
    footprint = act_bytes + wgt_bytes
    vmem_limit = (min(footprint + (8 << 20), 60 << 20)
                  if footprint > (24 << 20) else None)

    out_padded = pl.pallas_call(
        classifier_kernel,
        out_shape=jax.ShapeDtypeStruct((Bp, Sp), jnp.float32),
        grid=(Bp // TB,),
        in_specs=[
            pl.BlockSpec((TB, E), lambda i: (i, 0)),   # x: streamed over batch
            pl.BlockSpec((E, E), lambda i: (0, 0)),    # W1: VMEM-resident
            pl.BlockSpec((1, E), lambda i: (0, 0)),    # b1
            pl.BlockSpec((E, Sp), lambda i: (0, 0)),   # W2: VMEM-resident
            pl.BlockSpec((1, Sp), lambda i: (0, 0)),   # b2 (padded classes -> -1e30)
        ],
        out_specs=pl.BlockSpec((TB, Sp), lambda i: (i, 0)),
        compiler_params=pltpu.CompilerParams(
            dimension_semantics=("parallel",),
            vmem_limit_bytes=vmem_limit),
        cost_estimate=cost,
    )(x_p, w1_p, b1_p, w2_p, b2_p)

    # Slice back to the logical (B, S) result.
    return out_padded[:B, :S]


def make_classifier(w1, b1, w2, b2, *, tb=512):
    """One-time init: cast weights to bf16 and pad ONLY the class axis (so the
    output store is lane-dense). Weights are in (in, out) layout, i.e. the
    transpose of nn.Linear's (out, in) storage. Returns a jitted forward(x)."""
    E = w1.shape[0]
    S = w2.shape[1]
    Sp = _round_up(max(S, 128), 128)

    w1_p = w1.astype(jnp.bfloat16)                                    # (E, E)
    b1_p = b1.reshape(1, E).astype(jnp.float32)                       # (1, E)
    w2_p = jnp.pad(w2, ((0, 0), (0, Sp - S))).astype(jnp.bfloat16)    # (E, Sp)
    b2_p = jnp.pad(b2, (0, Sp - S),
                   constant_values=_NEG_BIG).reshape(1, Sp).astype(jnp.float32)

    def forward(x):
        return _classifier_forward(x, w1_p, b1_p, w2_p, b2_p, S, tb=tb)

    return jax.jit(forward)


def reference_forward(x, w1, b1, w2, b2):
    h = jnp.maximum(x @ w1 + b1, 0.0)
    logits = h @ w2 + b2
    return jax.nn.softmax(logits, axis=1)


if __name__ == "__main__":
    # Small, deterministic shapes: batch=8, embedding_size=32, num_speakers=16
    B, E, S = 8, 32, 16
    key = jax.random.PRNGKey(0)
    kx, k1, kb1, k2, kb2 = jax.random.split(key, 5)

    x = jax.random.normal(kx, (B, E), dtype=jnp.float32)
    # nn.Linear stores (out, in); we directly build the transposed (in, out) form.
    w1 = jax.random.normal(k1, (E, E), dtype=jnp.float32) * 0.1
    b1 = jax.random.normal(kb1, (E,), dtype=jnp.float32) * 0.1
    w2 = jax.random.normal(k2, (E, S), dtype=jnp.float32) * 0.1
    b2 = jax.random.normal(kb2, (S,), dtype=jnp.float32) * 0.1

    classifier = make_classifier(w1, b1, w2, b2)   # init-time weight prep
    out = jax.block_until_ready(classifier(x))

    ref = reference_forward(x, w1, b1, w2, b2)
    assert out.shape == (B, S)
    # Exact normalization -> rows sum to 1 up to f32 rounding.
    assert jnp.allclose(jnp.sum(out, axis=1), 1.0, atol=1e-3), "softmax rows must sum to 1"
    # bf16 MXU operands -> compare against the f32 reference at bf16 tolerance.
    assert jnp.allclose(out, ref, atol=2e-2, rtol=2e-2), "mismatch vs reference"

    print("KERNEL_OK")
</pallas_src>

<mosaic_0001>
module attributes {stable_mosaic.version = 11 : i64} {
  func.func @classifier_kernel(%arg0: i32, %arg1: memref<8x32xbf16, #tpu.memory_space<vmem>>, %arg2: memref<32x32xbf16, #tpu.memory_space<vmem>>, %arg3: memref<1x32xf32, #tpu.memory_space<vmem>>, %arg4: memref<32x128xbf16, #tpu.memory_space<vmem>>, %arg5: memref<1x128xf32, #tpu.memory_space<vmem>>, %arg6: memref<8x128xf32, #tpu.memory_space<vmem>>) attributes {dimension_semantics = [#tpu.dimension_semantics<parallel>], iteration_bounds = array<i64: 1>, scalar_prefetch = 0 : i64, scratch_operands = 0 : i64, tpu.core_type = #tpu.core_type<tc>, window_params = [{transform_indices = @transform_0, window_bounds = array<i64: 8, 32>}, {pipeline_mode = #tpu.pipeline_mode<synchronous>, transform_indices = @transform_1, window_bounds = array<i64: 32, 32>}, {pipeline_mode = #tpu.pipeline_mode<synchronous>, transform_indices = @transform_2, window_bounds = array<i64: 1, 32>}, {pipeline_mode = #tpu.pipeline_mode<synchronous>, transform_indices = @transform_3, window_bounds = array<i64: 32, 128>}, {pipeline_mode = #tpu.pipeline_mode<synchronous>, transform_indices = @transform_4, window_bounds = array<i64: 1, 128>}, {transform_indices = @transform_5, window_bounds = array<i64: 8, 128>}]} {
    %c0 = arith.constant 0 : index
    %c0_0 = arith.constant 0 : index
    %0 = vector.load %arg1[%c0, %c0_0] : memref<8x32xbf16, #tpu.memory_space<vmem>>, vector<8x32xbf16>
    %c0_1 = arith.constant 0 : index
    %c0_2 = arith.constant 0 : index
    %1 = vector.load %arg2[%c0_1, %c0_2] : memref<32x32xbf16, #tpu.memory_space<vmem>>, vector<32x32xbf16>
    %cst = arith.constant dense<0.000000e+00> : vector<8x32xf32>
    %2 = tpu.matmul %0, %1, %cst {dimension_numbers = #tpu.dot_dimension_numbers<[1], [0], [0], [1], [0, 0, 1, 1], [], []>} : vector<8x32xbf16>, vector<32x32xbf16>, vector<8x32xf32> -> vector<8x32xf32>
    %c0_3 = arith.constant 0 : index
    %c0_4 = arith.constant 0 : index
    %3 = vector.load %arg3[%c0_3, %c0_4] : memref<1x32xf32, #tpu.memory_space<vmem>>, vector<1x32xf32>
    %4 = vector.broadcast %3 : vector<1x32xf32> to vector<8x32xf32>
    %5 = arith.addf %2, %4 : vector<8x32xf32>
    %cst_5 = arith.constant 0.000000e+00 : f32
    %6 = vector.broadcast %cst_5 : f32 to vector<8x32xf32>
    %7 = arith.maximumf %5, %6 : vector<8x32xf32>
    %8 = arith.truncf %7 : vector<8x32xf32> to vector<8x32xbf16>
    %c0_6 = arith.constant 0 : index
    %c0_7 = arith.constant 0 : index
    %9 = vector.load %arg4[%c0_6, %c0_7] : memref<32x128xbf16, #tpu.memory_space<vmem>>, vector<32x128xbf16>
    %cst_8 = arith.constant dense<0.000000e+00> : vector<8x128xf32>
    %10 = tpu.matmul %8, %9, %cst_8 {dimension_numbers = #tpu.dot_dimension_numbers<[1], [0], [0], [1], [0, 0, 1, 1], [], []>} : vector<8x32xbf16>, vector<32x128xbf16>, vector<8x128xf32> -> vector<8x128xf32>
    %c0_9 = arith.constant 0 : index
    %c0_10 = arith.constant 0 : index
    %11 = vector.load %arg5[%c0_9, %c0_10] : memref<1x128xf32, #tpu.memory_space<vmem>>, vector<1x128xf32>
    %12 = vector.broadcast %11 : vector<1x128xf32> to vector<8x128xf32>
    %13 = arith.addf %10, %12 : vector<8x128xf32>
    %cst_11 = arith.constant dense<0xFF800000> : vector<8xf32>
    %14 = vector.multi_reduction <maximumf>, %13, %cst_11 [1] : vector<8x128xf32> to vector<8xf32>
    %15 = vector.shape_cast %14 : vector<8xf32> to vector<8x1xf32>
    %16 = vector.broadcast %15 : vector<8x1xf32> to vector<8x128xf32>
    %17 = arith.subf %13, %16 : vector<8x128xf32>
    %18 = math.exp %17 : vector<8x128xf32>
    %cst_12 = arith.constant dense<0.000000e+00> : vector<8xf32>
    %19 = vector.multi_reduction <add>, %18, %cst_12 [1] : vector<8x128xf32> to vector<8xf32>
    %20 = vector.shape_cast %19 : vector<8xf32> to vector<8x1xf32>
    %21 = tpu.reciprocal %20 : vector<8x1xf32> -> vector<8x1xf32>
    %22 = vector.broadcast %21 : vector<8x1xf32> to vector<8x128xf32>
    %23 = arith.mulf %18, %22 : vector<8x128xf32>
    %c0_13 = arith.constant 0 : index
    %c0_14 = arith.constant 0 : index
    %24 = vector.load %arg6[%c0_13, %c0_14] : memref<8x128xf32, #tpu.memory_space<vmem>>, vector<8x128xf32>
    tpu.vector_store %arg6[%c0_13, %c0_14], %23 {strides = array<i32>} : memref<8x128xf32, #tpu.memory_space<vmem>>, vector<8x128xf32>,
    return
  }
  func.func @transform_0(%arg0: i32) -> (i32, i32) {
    %c0_i32 = arith.constant 0 : i32
    %c0_i32_0 = arith.constant 0 : i32
    return %arg0, %c0_i32 : i32, i32
  }
  func.func @transform_1(%arg0: i32) -> (i32, i32) {
    %c0_i32 = arith.constant 0 : i32
    %c0_i32_0 = arith.constant 0 : i32
    %c0_i32_1 = arith.constant 0 : i32
    return %c0_i32, %c0_i32_0 : i32, i32
  }
  func.func @transform_2(%arg0: i32) -> (i32, i32) {
    %c0_i32 = arith.constant 0 : i32
    %c0_i32_0 = arith.constant 0 : i32
    %c0_i32_1 = arith.constant 0 : i32
    return %c0_i32, %c0_i32_0 : i32, i32
  }
  func.func @transform_3(%arg0: i32) -> (i32, i32) {
    %c0_i32 = arith.constant 0 : i32
    %c0_i32_0 = arith.constant 0 : i32
    %c0_i32_1 = arith.constant 0 : i32
    return %c0_i32, %c0_i32_0 : i32, i32
  }
  func.func @transform_4(%arg0: i32) -> (i32, i32) {
    %c0_i32 = arith.constant 0 : i32
    %c0_i32_0 = arith.constant 0 : i32
    %c0_i32_1 = arith.constant 0 : i32
    return %c0_i32, %c0_i32_0 : i32, i32
  }
  func.func @transform_5(%arg0: i32) -> (i32, i32) {
    %c0_i32 = arith.constant 0 : i32
    %c0_i32_0 = arith.constant 0 : i32
    return %arg0, %c0_i32 : i32, i32
  }
}

</mosaic_0001>

<llo_original>
// kernel: forward.1
$region0: #{forward.1}
  #allocation0 [shape = 'u32[]', space=smem, size = 0x4, offset = 0x4, fixed_abs, tag = 'smem constant byte address 0x4 - core index']
  #allocation1 [shape = 'u32[144,128]{1,0:T(1,128)}', space=vmem, size = 0x12000, scoped, tag = 'internal scratch']
  %s0 = inlined_call_operand.vmem [shape: bf16[8,32], index: 0, kind: input, shape index: {}]
  %s1 = inlined_call_operand.hbm [shape: bf16[32,32], index: 1, kind: input, shape index: {}]
  %s2 = inlined_call_operand.vmem [shape: f32[1,32], index: 2, kind: input, shape index: {}]
  %s3 = inlined_call_operand.vmem [shape: bf16[32,128], index: 3, kind: input, shape index: {}]
  %s4 = inlined_call_operand.vmem [shape: f32[1,128], index: 4, kind: input, shape index: {}]
  %s5 = inlined_call_operand.hbm [shape: f32[8,128], index: 5, kind: output, shape index: {}]
  %s6 = sld [smem:[#allocation0]]
  $region34: #{forward.1} parent=0
    _
  %s8 = ssub.s32 1, %s6
  %s9 = scalar_select 0, %s8, %s6
  $region1: #{forward.1} parent=0
    #allocation2 [shape = 'u8[8192]{0}', space=vmem, size = 0x2000, scoped, tag = 'input window, operand 1, single buffered']
    #allocation3 [shape = 's32[1]{0}', space=sflag, size = 0x4, scoped, tag = 'scoped memory for forward.1']
    #allocation4 [shape = 's32[1]{0}', space=sflag, size = 0x4, scoped, tag = 'scoped memory for forward.1']
    #allocation5 [shape = 'u8[4096]{0}', space=vmem, size = 0x1000, scoped, tag = 'output window, operand 0, single buffered']
    %10 = vsyncpa [#allocation3], 0
    %11 = vsyncpa [#allocation4], 0
    // Predicated region
    $region2: #{forward.1} parent=1 // pred_check
      _
    $region3: #{forward.1} parent=1 // pred_check_branch
      %13 = sbr.rel (0) target = $region5
    $region4: #{forward.1} parent=1 // pred_region
      _
    $region5: #{forward.1} parent=1 // pred_fallthru
      _
    // Predicated region
    $region6: #{forward.1} parent=1 // pred_check
      _
    $region7: #{forward.1} parent=1 // pred_check_branch
      %15 = sbr.rel (0) target = $region9
    $region8: #{forward.1} parent=1 // pred_region
      %s17 = ssub.s32 256, 256
      %18 = vsyncadd [#allocation3], %s17
      %s19 = sshll.u32 [#allocation2], 4
      %s20 = int_to_ptr.vmem [resolvable:$true] %s19
      %25 = dma.hbm_to_vmem [thread:$0]  %s1, 256, %s20, [#allocation3], 64, 64, 4
    $region9: #{forward.1} parent=1 // pred_fallthru
      _
    // Predicated region
    $region10: #{forward.1} parent=1 // pred_check
      _
    $region11: #{forward.1} parent=1 // pred_check_branch
      %27 = sbr.rel (0) target = $region13
    $region12: #{forward.1} parent=1 // pred_region
      _
    $region13: #{forward.1} parent=1 // pred_fallthru
      _
    // Predicated region
    $region14: #{forward.1} parent=1 // pred_check
      _
    $region15: #{forward.1} parent=1 // pred_check_branch
      %29 = sbr.rel (0) target = $region17
    $region16: #{forward.1} parent=1 // pred_region
      _
    $region17: #{forward.1} parent=1 // pred_fallthru
      _
    // Predicated region
    $region18: #{forward.1} parent=1 // pred_check
      _
    $region19: #{forward.1} parent=1 // pred_check_branch
      %31 = sbr.rel (0) target = $region21
    $region20: #{forward.1} parent=1 // pred_region
      _
    $region21: #{forward.1} parent=1 // pred_fallthru
      _
    // Predicated region
    $region22: #{forward.1} parent=1 // pred_check
      _
    $region23: #{forward.1} parent=1 // pred_check_branch
      %33 = sbr.rel (0) target = $region25
    $region24: #{forward.1} parent=1 // pred_region
      %34 = dma.done [#allocation3], 256
    $region25: #{forward.1} parent=1 // pred_fallthru
      _
    %v36 = vld [vmem:[%s0] sm:$0xf]
    %v37 = vld [vmem:[#allocation2] sm:$0xf]
    %v38 = vld [vmem:[#allocation2 + $0x4] sm:$0xf]
    %v39 = vld [vmem:[#allocation2 + $0x8] sm:$0xf]
    %v40 = vld [vmem:[#allocation2 + $0xc] sm:$0xf]
    %v41 = vld [vmem:[%s2] sm:$0x1]
    %v43 = vlaneseq
    %v44 = vshrl.u32 %v43, 7
    %v45 = vsub.s32 0, %v44
    %v46 = vrot.slane %v41, %v45
    %v52 = vunpack.c.l.b16 %v37
    %v53 = vunpack.c.l.b16 %v38
    %v54 = vunpack.c.l.b16 %v39
    %v55 = vunpack.c.l.b16 %v40
    %v56 = vpack.c.b16 %v53, %v52
    %v57 = vpack.c.b16 %v55, %v54
    %vm60 = vcmask 261120
    %v62 = vsel %vm60, %v36, 0
    %64 = vmatprep.subr.bf16.mxu0 0
    %65 = vmatpush1.bf16.msra.mxu0 %v56
    %66 = vmatprep.subr.bf16.mxu0 0
    %67 = vmatpush1.bf16.msra.mxu0 %v57
    %68 = vmatprep.subr.bf16.mxu0 0
    %69 = vmatpush1.bf16.msra.mxu0 0
    %70 = vmatprep.subr.bf16.mxu0 0
    %71 = vmatpush1.bf16.msra.mxu0 0
    %72 = vmatprep.subr.bf16.mxu0 0
    %73 = vmatpush1.bf16.msra.mxu0 0
    %74 = vmatprep.subr.bf16.mxu0 0
    %75 = vmatpush1.bf16.msra.mxu0 0
    %76 = vmatprep.subr.bf16.mxu0 0
    %77 = vmatpush1.bf16.msra.mxu0 0
    %78 = vmatprep.subr.bf16.mxu0 0
    %79 = vmatpush1.bf16.msra.mxu0 0
    %80 = vmatprep.subr.bf16.mxu0 0
    %81 = vmatpush1.bf16.msra.mxu0 0
    %82 = vmatprep.subr.bf16.mxu0 0
    %83 = vmatpush1.bf16.msra.mxu0 0
    %84 = vmatprep.subr.bf16.mxu0 0
    %85 = vmatpush1.bf16.msra.mxu0 0
    %86 = vmatprep.subr.bf16.mxu0 0
    %87 = vmatpush1.bf16.msra.mxu0 0
    %88 = vmatprep.subr.bf16.mxu0 0
    %89 = vmatpush1.bf16.msra.mxu0 0
    %90 = vmatprep.subr.bf16.mxu0 0
    %91 = vmatpush1.bf16.msra.mxu0 0
    %92 = vmatprep.subr.bf16.mxu0 0
    %93 = vmatpush1.bf16.msra.mxu0 0
    %94 = vmatprep.subr.bf16.mxu0 0
    %95 = vmatpush1.bf16.msra.mxu0 0
    %96 = vmatprep.mubr.bf16.mxu0 0
    %97 = vmatmul.mubr.bf16.gmra.mrb[0].mxu0 %v62
    %v98 = vpop.f32.mrb[0].mxu0
    %v99 = vadd.f32 %v46, %v98
    %v100 = vpop.f32.mrb[0].mxu0
    %v101 = vpop.f32.mrb[0].mxu0
    %v102 = vpop.f32.mrb[0].mxu0
    %103 = vdwg.mxu0
    %v104 = vmax.f32 %v99, 0.0
    %v105 = vpack.c.bf16 %v104, %v104
    %v106 = vld [vmem:[%s3] sm:$0xf]
    %v107 = vld [vmem:[%s3 + $0x4] sm:$0xf]
    %v108 = vld [vmem:[%s3 + $0x8] sm:$0xf]
    %v109 = vld [vmem:[%s3 + $0xc] sm:$0xf]
    %v110 = vld [vmem:[%s4] sm:$0x1]
    %v112 = vlaneseq
    %v113 = vshrl.u32 %v112, 7
    %v114 = vsub.s32 0, %v113
    %v115 = vrot.slane %v110, %v114
    %v121 = vunpack.c.l.b16 %v106
    %v122 = vunpack.c.l.b16 %v107
    %v123 = vunpack.c.l.b16 %v108
    %v124 = vunpack.c.l.b16 %v109
    %v125 = vpack.c.b16 %v122, %v121
    %v126 = vpack.c.b16 %v124, %v123
    %v130 = vsel %vm60, %v105, 0
    %132 = vmatprep.subr.bf16.mxu0 0
    %133 = vmatpush1.bf16.msra.mxu0 %v125
    %134 = vmatprep.subr.bf16.mxu0 0
    %135 = vmatpush1.bf16.msra.mxu0 %v126
    %136 = vmatprep.subr.bf16.mxu0 0
    %137 = vmatpush1.bf16.msra.mxu0 0
    %138 = vmatprep.subr.bf16.mxu0 0
    %139 = vmatpush1.bf16.msra.mxu0 0
    %140 = vmatprep.subr.bf16.mxu0 0
    %141 = vmatpush1.bf16.msra.mxu0 0
    %142 = vmatprep.subr.bf16.mxu0 0
    %143 = vmatpush1.bf16.msra.mxu0 0
    %144 = vmatprep.subr.bf16.mxu0 0
    %145 = vmatpush1.bf16.msra.mxu0 0
    %146 = vmatprep.subr.bf16.mxu0 0
    %147 = vmatpush1.bf16.msra.mxu0 0
    %148 = vmatprep.subr.bf16.mxu0 0
    %149 = vmatpush1.bf16.msra.mxu0 0
    %150 = vmatprep.subr.bf16.mxu0 0
    %151 = vmatpush1.bf16.msra.mxu0 0
    %152 = vmatprep.subr.bf16.mxu0 0
    %153 = vmatpush1.bf16.msra.mxu0 0
    %154 = vmatprep.subr.bf16.mxu0 0
    %155 = vmatpush1.bf16.msra.mxu0 0
    %156 = vmatprep.subr.bf16.mxu0 0
    %157 = vmatpush1.bf16.msra.mxu0 0
    %158 = vmatprep.subr.bf16.mxu0 0
    %159 = vmatpush1.bf16.msra.mxu0 0
    %160 = vmatprep.subr.bf16.mxu0 0
    %161 = vmatpush1.bf16.msra.mxu0 0
    %162 = vmatprep.subr.bf16.mxu0 0
    %163 = vmatpush1.bf16.msra.mxu0 0
    %164 = vmatprep.mubr.bf16.mxu0 0
    %165 = vmatmul.mubr.bf16.gmra.mrb[0].mxu0 %v130
    %v166 = vpop.f32.mrb[0].mxu0
    %v167 = vadd.f32 %v115, %v166
    %v168 = vpop.f32.mrb[0].mxu0
    %v169 = vpop.f32.mrb[0].mxu0
    %v170 = vpop.f32.mrb[0].mxu0
    %171 = vdwg.mxu0
    %172 = vmax.xlane.f32.xlu0 %v167
    %v173 = vpop.xlane.xlu0 %172
    %v174 = vsub.f32 %v167, %v173
    %v175 = vmul.f32 %v174, 1.442695
    %v176 = vpow.pop %v175
    %177 = vadd.xlane.f32.xlu0 %v176
    %v178 = vpop.xlane.xlu0 %177
    %v179 = vrcp.pop %v178
    %v180 = vmul.f32 %v176, %v179
    %181 = vst [vmem:[#allocation5] sm:$0xff] %v180
    // Predicated region
    $region26: #{forward.1} parent=1 // pred_check
      _
    $region27: #{forward.1} parent=1 // pred_check_branch
      %183 = sbr.rel (0) target = $region29
    $region28: #{forward.1} parent=1 // pred_region
      %s185 = ssub.s32 128, 128
      %186 = vsyncadd [#allocation4], %s185
      %s188 = sshll.u32 [#allocation5], 4
      %s189 = int_to_ptr.vmem [resolvable:$true] %s188
      %191 = dma.vmem_to_hbm [thread:$0]  %s189, 128, %s5, [#allocation4]
    $region29: #{forward.1} parent=1 // pred_fallthru
      _
    // Predicated region
    $region30: #{forward.1} parent=1 // pred_check
      _
    $region31: #{forward.1} parent=1 // pred_check_branch
      %193 = sbr.rel (0) target = $region33
    $region32: #{forward.1} parent=1 // pred_region
      %194 = dma.done [#allocation4], 128
    $region33: #{forward.1} parent=1 // pred_fallthru
      _
    %195 = vsyncpa [#allocation3], 1
    %196 = vsyncpa [#allocation4], 1

</llo_original>
